<compile_context>
chip_gen: v7x
topology: tpu7x:2x2x1
jax: 0.10.0
libtpu: 0.0.40
codegen_flags: <defaults>
</compile_context>

<pallas_src>
import jax
import jax.numpy as jnp
from jax import lax
from jax.experimental import pallas as pl
from jax.experimental.pallas import tpu as pltpu


def _round_up(x: int, m: int) -> int:
    return (x + m - 1) // m * m


# ---------------------------------------------------------------------------
# MultiModelProjector:  y = x @ W.T + b   (nn.Linear(patch_dim, token_dim))
# ---------------------------------------------------------------------------
def _linear_kernel(x_ref, w_ref, b_ref, o_ref):
    # K is fully resident -> one MXU pass per (i, j) tile, no accumulator scratch.
    o_ref[...] = (
        jnp.dot(x_ref[...], w_ref[...], preferred_element_type=jnp.float32)
        + b_ref[...]
    ).astype(o_ref.dtype)


def prepare_projector_params(weight, bias, compute_dtype=jnp.bfloat16):
    """One-time parameter prep: torch-layout (N, K) weight -> (K, N) bf16 panel."""
    wt = weight.T.astype(compute_dtype)          # lane-dense along token_dim
    b2 = bias.astype(jnp.float32).reshape(1, -1)
    return wt, b2


def multimodal_projector(patch_embeddings, wt, bias2d, *, tm=256, tn=256):
    """Pallas equivalent of nn.Linear(patch_dim, token_dim)(patch_embeddings).

    patch_embeddings: (B, P, K)
    wt:               (K, N) prepared weight (see prepare_projector_params)
    bias2d:           (1, N) f32 bias
    returns:          (B, P, N) with dtype == patch_embeddings.dtype
    """
    B, P, K = patch_embeddings.shape
    K2, N = wt.shape
    assert K == K2, (K, K2)
    M = B * P

    x = patch_embeddings.reshape(M, K).astype(wt.dtype)   # bf16 halves HBM/VMEM bytes

    tm = min(tm, _round_up(M, 8))
    tn = min(tn, _round_up(N, 128))
    M_pad = _round_up(M, tm)
    N_pad = _round_up(N, tn)

    if M_pad != M:
        x = jnp.pad(x, ((0, M_pad - M), (0, 0)))
    if N_pad != N:
        wt = jnp.pad(wt, ((0, 0), (0, N_pad - N)))
        bias2d = jnp.pad(bias2d, ((0, 0), (0, N_pad - N)))

    out = pl.pallas_call(
        _linear_kernel,
        out_shape=jax.ShapeDtypeStruct((M_pad, N_pad), patch_embeddings.dtype),
        grid_spec=pltpu.PrefetchScalarGridSpec(
            num_scalar_prefetch=0,
            # j (N tiles) outermost, i (M tiles) innermost: the (K, tn) weight
            # panel's block index is constant across the inner loop -> resident.
            grid=(N_pad // tn, M_pad // tm),
            in_specs=[
                pl.BlockSpec((tm, K), lambda j, i: (i, 0)),
                pl.BlockSpec((K, tn), lambda j, i: (0, j)),
                pl.BlockSpec((1, tn), lambda j, i: (0, j)),
            ],
            out_specs=pl.BlockSpec((tm, tn), lambda j, i: (i, j)),
        ),
        compiler_params=pltpu.CompilerParams(
            dimension_semantics=("parallel", "parallel"),
            # double-buffered tiles at tm=tn=256, K~1-2k bf16 are ~3 MiB total;
            # 32 MiB cap is safe on v5e/v6e (128 MiB) and v7x (64 MiB).
            vmem_limit_bytes=32 * 1024 * 1024,
        ),
    )(x, wt, bias2d)
    return out[:M, :N].reshape(B, P, N)


# ---------------------------------------------------------------------------
# TextTokenEmbedding: manual-DMA row gather from an HBM table, rows DMA'd
# directly into the lane-dense output block (no VMEM scratch, no vreg copy).
# ---------------------------------------------------------------------------
def _make_gather_kernel(block_tokens: int):
    unroll = min(8, block_tokens)

    def kernel(ids_ref, w_hbm, out_ref, sems):
        base = pl.program_id(0) * block_tokens

        # Start all row DMAs for this block before waiting on any of them, so
        # `block_tokens` HBM round-trips are in flight simultaneously.
        def issue(b, carry):
            tok = ids_ref[base + b]
            pltpu.make_async_copy(w_hbm.at[tok], out_ref.at[b], sems.at[b]).start()
            return carry

        lax.fori_loop(0, block_tokens, issue, 0, unroll=unroll)

        # The src slice here only supplies the shape/byte-count for the wait;
        # every row has identical shape, so w_hbm.at[0] matches the .start() copy.
        def wait(b, carry):
            pltpu.make_async_copy(w_hbm.at[0], out_ref.at[b], sems.at[b]).wait()
            return carry

        lax.fori_loop(0, block_tokens, wait, 0, unroll=unroll)

    return kernel


def text_token_embedding(token_ids, weight, *, block_tokens=256):
    """Pallas equivalent of nn.Embedding(V, D)(token_ids) forward gather.

    token_ids: (S,) integer ids
    weight:    (V, D) table (f32 or bf16); row 0 is the padding_idx row
    returns:   (S, D) with dtype == weight.dtype
    """
    S = token_ids.shape[0]
    V, D = weight.shape

    # Sublane-aligned token block; tiny S collapses to few grid steps.
    bt = min(_round_up(block_tokens, 8), _round_up(S, 8))
    # Prefer >= 2 grid steps so v7x's two TensorCores both get work.
    if bt >= _round_up(S, 8) and S > 8:
        bt = _round_up((S + 1) // 2, 8)
    S_pad = _round_up(S, bt)

    # Clamp ids so a bad id can never turn into an out-of-bounds HBM DMA
    # (PyTorch nn.Embedding would raise; padded-tail ids are 0 and sliced off).
    ids = jnp.clip(token_ids.astype(jnp.int32), 0, V - 1)
    ids = jnp.pad(ids, (0, S_pad - S))

    out = pl.pallas_call(
        _make_gather_kernel(bt),
        out_shape=jax.ShapeDtypeStruct((S_pad, D), weight.dtype),
        grid_spec=pltpu.PrefetchScalarGridSpec(
            num_scalar_prefetch=1,                         # ids -> SMEM
            grid=(S_pad // bt,),
            in_specs=[pl.BlockSpec(memory_space=pl.ANY)],  # table stays in HBM
            out_specs=pl.BlockSpec((bt, D), lambda i, ids: (i, 0)),
            scratch_shapes=[
                pltpu.SemaphoreType.DMA((bt,)),            # one sem per in-flight row
            ],
        ),
        compiler_params=pltpu.CompilerParams(
            dimension_semantics=("parallel",),             # v7x: 2 TCs split the sequence
            # double-buffered (bt, D) out tile at bt=256, D=2304 f32 ~ 4.7 MiB.
            vmem_limit_bytes=32 * 1024 * 1024,
        ),
    )(ids, weight)
    return out[:S]


if __name__ == "__main__":
    key = jax.random.PRNGKey(0)
    k1, k2, k3, k4, k5 = jax.random.split(key, 5)

    # ------------------ image branch (MultiModelProjector) ------------------
    # TODO(synk): pretrained HF image encoder not implemented; start from its output.
    BATCH, PATCHES, PATCH_DIM, TOKEN_DIM = 1, 64, 128, 256
    patch_emb = 0.05 * jax.random.normal(k1, (BATCH, PATCHES, PATCH_DIM), jnp.float32)
    proj_w = 0.05 * jax.random.normal(k2, (TOKEN_DIM, PATCH_DIM), jnp.float32)  # torch layout
    proj_b = 0.05 * jax.random.normal(k3, (TOKEN_DIM,), jnp.float32)

    wt, b2 = prepare_projector_params(proj_w, proj_b)      # one-time param prep
    img_tok = jax.block_until_ready(multimodal_projector(patch_emb, wt, b2))
    img_ref = jnp.einsum("bpk,nk->bpn", patch_emb, proj_w) + proj_b
    assert img_tok.shape == (BATCH, PATCHES, TOKEN_DIM), img_tok.shape
    assert bool(jnp.allclose(img_tok, img_ref, atol=2e-2, rtol=2e-2))  # bf16 MXU path

    # ------------------ text branch (TextTokenEmbedding) --------------------
    # TODO(synk): sentencepiece text->id encoding not implemented; start from ids.
    VOCAB, EMBED_DIM, SEQ = 512, 256, 11        # real module: V=257216, D=2304
    weight = 0.02 * jax.random.normal(k4, (VOCAB, EMBED_DIM), jnp.float32)
    weight = weight.at[0].set(0.0)              # nn.Embedding padding_idx=0 row
    token_ids = jax.random.randint(k5, (SEQ,), 0, VOCAB, dtype=jnp.int32)
    token_ids = token_ids.at[1].set(0)          # include a padding token

    txt_tok = jax.block_until_ready(text_token_embedding(token_ids, weight))
    txt_ref = jnp.take(weight, token_ids, axis=0)
    assert txt_tok.shape == (SEQ, EMBED_DIM), txt_tok.shape
    assert txt_tok.dtype == weight.dtype
    assert bool(jnp.all(txt_tok[1] == 0.0))                # padding row is zero
    assert bool(jnp.allclose(txt_tok, txt_ref, atol=0.0))  # exact gather

    # bf16 table path (halves HBM gather bytes; biggest relative win on v5e).
    weight_bf16 = weight.astype(jnp.bfloat16)
    txt_bf16 = jax.block_until_ready(text_token_embedding(token_ids, weight_bf16))
    assert txt_bf16.dtype == jnp.bfloat16
    assert bool(jnp.all(txt_bf16 == jnp.take(weight_bf16, token_ids, axis=0)))

    print("KERNEL_OK")
</pallas_src>

<mosaic_0001>
module attributes {stable_mosaic.version = 11 : i64} {
  func.func @_linear_kernel(%arg0: i32, %arg1: i32, %arg2: memref<64x128xbf16, #tpu.memory_space<vmem>>, %arg3: memref<128x256xbf16, #tpu.memory_space<vmem>>, %arg4: memref<1x256xf32, #tpu.memory_space<vmem>>, %arg5: memref<64x256xf32, #tpu.memory_space<vmem>>) attributes {dimension_semantics = [#tpu.dimension_semantics<parallel>, #tpu.dimension_semantics<parallel>], iteration_bounds = array<i64: 1, 1>, scalar_prefetch = 0 : i64, scratch_operands = 0 : i64, tpu.core_type = #tpu.core_type<tc>, window_params = [{transform_indices = @transform_0, window_bounds = array<i64: 64, 128>}, {transform_indices = @transform_1, window_bounds = array<i64: 128, 256>}, {transform_indices = @transform_2, window_bounds = array<i64: 1, 256>}, {transform_indices = @transform_3, window_bounds = array<i64: 64, 256>}]} {
    %c0 = arith.constant 0 : index
    %c0_0 = arith.constant 0 : index
    %0 = vector.load %arg2[%c0, %c0_0] : memref<64x128xbf16, #tpu.memory_space<vmem>>, vector<64x128xbf16>
    %c0_1 = arith.constant 0 : index
    %c0_2 = arith.constant 0 : index
    %1 = vector.load %arg3[%c0_1, %c0_2] : memref<128x256xbf16, #tpu.memory_space<vmem>>, vector<128x256xbf16>
    %cst = arith.constant dense<0.000000e+00> : vector<64x256xf32>
    %2 = tpu.matmul %0, %1, %cst {dimension_numbers = #tpu.dot_dimension_numbers<[1], [0], [0], [1], [0, 0, 1, 1], [], []>} : vector<64x128xbf16>, vector<128x256xbf16>, vector<64x256xf32> -> vector<64x256xf32>
    %c0_3 = arith.constant 0 : index
    %c0_4 = arith.constant 0 : index
    %3 = vector.load %arg4[%c0_3, %c0_4] : memref<1x256xf32, #tpu.memory_space<vmem>>, vector<1x256xf32>
    %4 = vector.broadcast %3 : vector<1x256xf32> to vector<64x256xf32>
    %5 = arith.addf %2, %4 : vector<64x256xf32>
    %c0_5 = arith.constant 0 : index
    %c0_6 = arith.constant 0 : index
    %6 = vector.load %arg5[%c0_5, %c0_6] : memref<64x256xf32, #tpu.memory_space<vmem>>, vector<64x256xf32>
    tpu.vector_store %arg5[%c0_5, %c0_6], %5 {strides = array<i32>} : memref<64x256xf32, #tpu.memory_space<vmem>>, vector<64x256xf32>,
    return
  }
  func.func @transform_0(%arg0: i32, %arg1: i32) -> (i32, i32) {
    %c0_i32 = arith.constant 0 : i32
    %c0_i32_0 = arith.constant 0 : i32
    return %arg1, %c0_i32 : i32, i32
  }
  func.func @transform_1(%arg0: i32, %arg1: i32) -> (i32, i32) {
    %c0_i32 = arith.constant 0 : i32
    %c0_i32_0 = arith.constant 0 : i32
    return %c0_i32, %arg0 : i32, i32
  }
  func.func @transform_2(%arg0: i32, %arg1: i32) -> (i32, i32) {
    %c0_i32 = arith.constant 0 : i32
    %c0_i32_0 = arith.constant 0 : i32
    return %c0_i32, %arg0 : i32, i32
  }
  func.func @transform_3(%arg0: i32, %arg1: i32) -> (i32, i32) {
    %c0_i32 = arith.constant 0 : i32
    return %arg1, %arg0 : i32, i32
  }
}

</mosaic_0001>

<llo_original>
// kernel: tpu_custom_call.1
$region0: #{tpu_custom_call.1}
  #allocation0 [shape = 'u32[]', space=smem, size = 0x4, offset = 0x4, fixed_abs, tag = 'smem constant byte address 0x4 - core index']
  #allocation1 [shape = 'u32[144,128]{1,0:T(1,128)}', space=vmem, size = 0x12000, scoped, tag = 'internal scratch']
  %s0 = inlined_call_operand.hbm [shape: bf16[64,128], index: 0, kind: input, shape index: {}]
  %s1 = inlined_call_operand.hbm [shape: bf16[128,256], index: 1, kind: input, shape index: {}]
  %s2 = inlined_call_operand.vmem [shape: f32[1,256], index: 2, kind: input, shape index: {}]
  %s3 = inlined_call_operand.hbm [shape: f32[64,256], index: 3, kind: output, shape index: {}]
  %s4 = sld [smem:[#allocation0]]
  $region30: #{tpu_custom_call.1} parent=0
    _
  %s6 = ssub.s32 1, %s4
  %s7 = scalar_select 0, %s6, %s4
  $region1: #{tpu_custom_call.1} parent=0
    #allocation2 [shape = 'u8[16384]{0}', space=vmem, size = 0x4000, scoped, tag = 'input window, operand 0, single buffered']
    #allocation3 [shape = 's32[1]{0}', space=sflag, size = 0x4, scoped, tag = 'scoped memory for tpu_custom_call.1']
    #allocation4 [shape = 's32[1]{0}', space=sflag, size = 0x4, scoped, tag = 'scoped memory for tpu_custom_call.1']
    #allocation5 [shape = 'u8[65536]{0}', space=vmem, size = 0x10000, scoped, tag = 'input window, operand 1, single buffered']
    #allocation6 [shape = 's32[1]{0}', space=sflag, size = 0x4, scoped, tag = 'scoped memory for tpu_custom_call.1']
    #allocation7 [shape = 'u8[65536]{0}', space=vmem, size = 0x10000, scoped, tag = 'output window, operand 0, single buffered']
    %8 = vsyncpa [#allocation3], 0
    %9 = vsyncpa [#allocation6], 0
    %10 = vsyncpa [#allocation4], 0
    // Predicated region
    $region2: #{tpu_custom_call.1} parent=1 // pred_check
      _
    $region3: #{tpu_custom_call.1} parent=1 // pred_check_branch
      %12 = sbr.rel (0) target = $region5
    $region4: #{tpu_custom_call.1} parent=1 // pred_region
      %s14 = ssub.s32 512, 512
      %15 = vsyncadd [#allocation3], %s14
      %s16 = sshll.u32 [#allocation2], 4
      %s17 = int_to_ptr.vmem [resolvable:$true] %s16
      %22 = dma.hbm_to_vmem [thread:$0]  %s0, 512, %s17, [#allocation3], 64, 64, 4
    $region5: #{tpu_custom_call.1} parent=1 // pred_fallthru
      _
    // Predicated region
    $region6: #{tpu_custom_call.1} parent=1 // pred_check
      _
    $region7: #{tpu_custom_call.1} parent=1 // pred_check_branch
      %24 = sbr.rel (0) target = $region9
    $region8: #{tpu_custom_call.1} parent=1 // pred_region
      %s26 = ssub.s32 2048, 2048
      %27 = vsyncadd [#allocation6], %s26
      %s28 = sshll.u32 [#allocation5], 4
      %s29 = int_to_ptr.vmem [resolvable:$true] %s28
      %34 = dma.hbm_to_vmem [thread:$0]  %s1, 2048, %s29, [#allocation6], 128, 128, 8
    $region9: #{tpu_custom_call.1} parent=1 // pred_fallthru
      _
    // Predicated region
    $region10: #{tpu_custom_call.1} parent=1 // pred_check
      _
    $region11: #{tpu_custom_call.1} parent=1 // pred_check_branch
      %36 = sbr.rel (0) target = $region13
    $region12: #{tpu_custom_call.1} parent=1 // pred_region
      _
    $region13: #{tpu_custom_call.1} parent=1 // pred_fallthru
      _
    // Predicated region
    $region14: #{tpu_custom_call.1} parent=1 // pred_check
      _
    $region15: #{tpu_custom_call.1} parent=1 // pred_check_branch
      %38 = sbr.rel (0) target = $region17
    $region16: #{tpu_custom_call.1} parent=1 // pred_region
      %39 = dma.done [#allocation3], 512
    $region17: #{tpu_custom_call.1} parent=1 // pred_fallthru
      _
    // Predicated region
    $region18: #{tpu_custom_call.1} parent=1 // pred_check
      _
    $region19: #{tpu_custom_call.1} parent=1 // pred_check_branch
      %41 = sbr.rel (0) target = $region21
    $region20: #{tpu_custom_call.1} parent=1 // pred_region
      %42 = dma.done [#allocation6], 2048
    $region21: #{tpu_custom_call.1} parent=1 // pred_fallthru
      _
    %v44 = vld [vmem:[#allocation2] sm:$0xf]
    %v45 = vld [vmem:[#allocation2 + $0x4] sm:$0xf]
    %v46 = vld [vmem:[#allocation2 + $0x8] sm:$0xf]
    %v47 = vld [vmem:[#allocation2 + $0xc] sm:$0xf]
    %v48 = vld [vmem:[#allocation2 + $0x10] sm:$0xf]
    %v49 = vld [vmem:[#allocation2 + $0x14] sm:$0xf]
    %v50 = vld [vmem:[#allocation2 + $0x18] sm:$0xf]
    %v51 = vld [vmem:[#allocation2 + $0x1c] sm:$0xf]
    %v52 = vld [vmem:[#allocation5] sm:$0xff]
    %v53 = vld [vmem:[#allocation5 + $0x8] sm:$0xff]
    %v54 = vld [vmem:[#allocation5 + $0x10] sm:$0xff]
    %v55 = vld [vmem:[#allocation5 + $0x18] sm:$0xff]
    %v56 = vld [vmem:[#allocation5 + $0x20] sm:$0xff]
    %v57 = vld [vmem:[#allocation5 + $0x28] sm:$0xff]
    %v58 = vld [vmem:[#allocation5 + $0x30] sm:$0xff]
    %v59 = vld [vmem:[#allocation5 + $0x38] sm:$0xff]
    %v60 = vld [vmem:[#allocation5 + $0x40] sm:$0xff]
    %v61 = vld [vmem:[#allocation5 + $0x48] sm:$0xff]
    %v62 = vld [vmem:[#allocation5 + $0x50] sm:$0xff]
    %v63 = vld [vmem:[#allocation5 + $0x58] sm:$0xff]
    %v64 = vld [vmem:[#allocation5 + $0x60] sm:$0xff]
    %v65 = vld [vmem:[#allocation5 + $0x68] sm:$0xff]
    %v66 = vld [vmem:[#allocation5 + $0x70] sm:$0xff]
    %v67 = vld [vmem:[#allocation5 + $0x78] sm:$0xff]
    %v68 = vld [vmem:[%s2] sm:$0x3]
    %v70 = vlaneseq
    %v71 = vshrl.u32 %v70, 7
    %v72 = vsub.s32 0, %v71
    %v73 = vrot.slane %v68, %v72
    %v74 = vlaneseq
    %v75 = vshrl.u32 %v74, 7
    %v76 = vsub.s32 1, %v75
    %v77 = vrot.slane %v68, %v76
    %v88 = vunpack.c.l.b16 %v44
    %v89 = vunpack.c.l.b16 %v45
    %v90 = vunpack.c.l.b16 %v46
    %v91 = vunpack.c.l.b16 %v47
    %v92 = vunpack.c.l.b16 %v48
    %v93 = vunpack.c.l.b16 %v49
    %v94 = vunpack.c.l.b16 %v50
    %v95 = vunpack.c.l.b16 %v51
    %v96 = vpack.c.b16 %v89, %v88
    %v97 = vpack.c.b16 %v91, %v90
    %v98 = vpack.c.b16 %v93, %v92
    %v99 = vpack.c.b16 %v95, %v94
    %v120 = vunpack.c.l.b16 %v52
    %v121 = vunpack.c.h.b16 %v52
    %v122 = vunpack.c.l.b16 %v53
    %v123 = vunpack.c.h.b16 %v53
    %v124 = vunpack.c.l.b16 %v54
    %v125 = vunpack.c.h.b16 %v54
    %v126 = vunpack.c.l.b16 %v55
    %v127 = vunpack.c.h.b16 %v55
    %v128 = vunpack.c.l.b16 %v56
    %v129 = vunpack.c.h.b16 %v56
    %v130 = vunpack.c.l.b16 %v57
    %v131 = vunpack.c.h.b16 %v57
    %v132 = vunpack.c.l.b16 %v58
    %v133 = vunpack.c.h.b16 %v58
    %v134 = vunpack.c.l.b16 %v59
    %v135 = vunpack.c.h.b16 %v59
    %v136 = vunpack.c.l.b16 %v60
    %v137 = vunpack.c.h.b16 %v60
    %v138 = vunpack.c.l.b16 %v61
    %v139 = vunpack.c.h.b16 %v61
    %v140 = vunpack.c.l.b16 %v62
    %v141 = vunpack.c.h.b16 %v62
    %v142 = vunpack.c.l.b16 %v63
    %v143 = vunpack.c.h.b16 %v63
    %v144 = vunpack.c.l.b16 %v64
    %v145 = vunpack.c.h.b16 %v64
    %v146 = vunpack.c.l.b16 %v65
    %v147 = vunpack.c.h.b16 %v65
    %v148 = vunpack.c.l.b16 %v66
    %v149 = vunpack.c.h.b16 %v66
    %v150 = vunpack.c.l.b16 %v67
    %v151 = vunpack.c.h.b16 %v67
    %v152 = vpack.c.b16 %v122, %v120
    %v153 = vpack.c.b16 %v123, %v121
    %v154 = vpack.c.b16 %v126, %v124
    %v155 = vpack.c.b16 %v127, %v125
    %v156 = vpack.c.b16 %v130, %v128
    %v157 = vpack.c.b16 %v131, %v129
    %v158 = vpack.c.b16 %v134, %v132
    %v159 = vpack.c.b16 %v135, %v133
    %v160 = vpack.c.b16 %v138, %v136
    %v161 = vpack.c.b16 %v139, %v137
    %v162 = vpack.c.b16 %v142, %v140
    %v163 = vpack.c.b16 %v143, %v141
    %v164 = vpack.c.b16 %v146, %v144
    %v165 = vpack.c.b16 %v147, %v145
    %v166 = vpack.c.b16 %v150, %v148
    %v167 = vpack.c.b16 %v151, %v149
    %184 = vmatprep.subr.bf16.mxu0 %v153
    %185 = vmatpush1.bf16.msra.mxu0 %v152
    %186 = vmatprep.subr.bf16.mxu0 %v155
    %187 = vmatpush1.bf16.msra.mxu0 %v154
    %188 = vmatprep.subr.bf16.mxu0 %v157
    %189 = vmatpush1.bf16.msra.mxu0 %v156
    %190 = vmatprep.subr.bf16.mxu0 %v159
    %191 = vmatpush1.bf16.msra.mxu0 %v158
    %192 = vmatprep.subr.bf16.mxu0 %v161
    %193 = vmatpush1.bf16.msra.mxu0 %v160
    %194 = vmatprep.subr.bf16.mxu0 %v163
    %195 = vmatpush1.bf16.msra.mxu0 %v162
    %196 = vmatprep.subr.bf16.mxu0 %v165
    %197 = vmatpush1.bf16.msra.mxu0 %v164
    %198 = vmatprep.subr.bf16.mxu0 %v167
    %199 = vmatpush1.bf16.msra.mxu0 %v166
    %200 = vmatprep.subr.bf16.mxu0 0
    %201 = vmatpush1.bf16.msra.mxu0 0
    %202 = vmatprep.subr.bf16.mxu0 0
    %203 = vmatpush1.bf16.msra.mxu0 0
    %204 = vmatprep.subr.bf16.mxu0 0
    %205 = vmatpush1.bf16.msra.mxu0 0
    %206 = vmatprep.subr.bf16.mxu0 0
    %207 = vmatpush1.bf16.msra.mxu0 0
    %208 = vmatprep.subr.bf16.mxu0 0
    %209 = vmatpush1.bf16.msra.mxu0 0
    %210 = vmatprep.subr.bf16.mxu0 0
    %211 = vmatpush1.bf16.msra.mxu0 0
    %212 = vmatprep.subr.bf16.mxu0 0
    %213 = vmatpush1.bf16.msra.mxu0 0
    %214 = vmatprep.subr.bf16.mxu0 0
    %215 = vmatpush1.bf16.msra.mxu0 0
    %216 = vmatprep.mubr.bf16.mxu0 0
    %217 = vmatmul.mubr.bf16.gmra.mrb[0].mxu0 %v96
    %v218 = vpop.f32.mrb[0].mxu0
    %v219 = vadd.f32 %v73, %v218
    %v220 = vpop.f32.mrb[0].mxu0
    %v221 = vadd.f32 %v77, %v220
    %v222 = vpop.f32.mrb[0].mxu0
    %v223 = vadd.f32 %v73, %v222
    %v224 = vpop.f32.mrb[0].mxu0
    %v225 = vadd.f32 %v77, %v224
    %226 = vmatprep.mubr.bf16.mxu0 0
    %227 = vmatmul.mubr.bf16.gmra.mrb[0].mxu0 %v97
    %v228 = vpop.f32.mrb[0].mxu0
    %v229 = vadd.f32 %v73, %v228
    %v230 = vpop.f32.mrb[0].mxu0
    %v231 = vadd.f32 %v77, %v230
    %v232 = vpop.f32.mrb[0].mxu0
    %v233 = vadd.f32 %v73, %v232
    %v234 = vpop.f32.mrb[0].mxu0
    %v235 = vadd.f32 %v77, %v234
    %236 = vmatprep.mubr.bf16.mxu0 0
    %237 = vmatmul.mubr.bf16.gmra.mrb[0].mxu0 %v98
    %v238 = vpop.f32.mrb[0].mxu0
    %v239 = vadd.f32 %v73, %v238
    %v240 = vpop.f32.mrb[0].mxu0
    %v241 = vadd.f32 %v77, %v240
    %v242 = vpop.f32.mrb[0].mxu0
    %v243 = vadd.f32 %v73, %v242
    %v244 = vpop.f32.mrb[0].mxu0
    %v245 = vadd.f32 %v77, %v244
    %246 = vmatprep.mubr.bf16.mxu0 0
    %247 = vmatmul.mubr.bf16.gmra.mrb[0].mxu0 %v99
    %v248 = vpop.f32.mrb[0].mxu0
    %v249 = vadd.f32 %v73, %v248
    %v250 = vpop.f32.mrb[0].mxu0
    %v251 = vadd.f32 %v77, %v250
    %v252 = vpop.f32.mrb[0].mxu0
    %v253 = vadd.f32 %v73, %v252
    %v254 = vpop.f32.mrb[0].mxu0
    %v255 = vadd.f32 %v77, %v254
    %256 = vdwg.mxu0
    %257 = vst [vmem:[#allocation7] sm:$0xff] %v219
    %258 = vst [vmem:[#allocation7 + $0x8] sm:$0xff] %v221
    %259 = vst [vmem:[#allocation7 + $0x10] sm:$0xff] %v223
    %260 = vst [vmem:[#allocation7 + $0x18] sm:$0xff] %v225
    %261 = vst [vmem:[#allocation7 + $0x20] sm:$0xff] %v229
    %262 = vst [vmem:[#allocation7 + $0x28] sm:$0xff] %v231
    %263 = vst [vmem:[#allocation7 + $0x30] sm:$0xff] %v233
    %264 = vst [vmem:[#allocation7 + $0x38] sm:$0xff] %v235
    %265 = vst [vmem:[#allocation7 + $0x40] sm:$0xff] %v239
    %266 = vst [vmem:[#allocation7 + $0x48] sm:$0xff] %v241
    %267 = vst [vmem:[#allocation7 + $0x50] sm:$0xff] %v243
    %268 = vst [vmem:[#allocation7 + $0x58] sm:$0xff] %v245
    %269 = vst [vmem:[#allocation7 + $0x60] sm:$0xff] %v249
    %270 = vst [vmem:[#allocation7 + $0x68] sm:$0xff] %v251
    %271 = vst [vmem:[#allocation7 + $0x70] sm:$0xff] %v253
    %272 = vst [vmem:[#allocation7 + $0x78] sm:$0xff] %v255
    // Predicated region
    $region22: #{tpu_custom_call.1} parent=1 // pred_check
      _
    $region23: #{tpu_custom_call.1} parent=1 // pred_check_branch
      %274 = sbr.rel (0) target = $region25
    $region24: #{tpu_custom_call.1} parent=1 // pred_region
      %s276 = ssub.s32 2048, 2048
      %277 = vsyncadd [#allocation4], %s276
      %s278 = sshll.u32 [#allocation7], 4
      %s279 = int_to_ptr.vmem [resolvable:$true] %s278
      %284 = dma.vmem_to_hbm [thread:$0]  %s279, 2048, %s3, [#allocation4], 256, 256, 16
    $region25: #{tpu_custom_call.1} parent=1 // pred_fallthru
      _
    // Predicated region
    $region26: #{tpu_custom_call.1} parent=1 // pred_check
      _
    $region27: #{tpu_custom_call.1} parent=1 // pred_check_branch
      %286 = sbr.rel (0) target = $region29
    $region28: #{tpu_custom_call.1} parent=1 // pred_region
      %287 = dma.done [#allocation4], 2048
    $region29: #{tpu_custom_call.1} parent=1 // pred_fallthru
      _
    %288 = vsyncpa [#allocation3], 1
    %289 = vsyncpa [#allocation6], 1
    %290 = vsyncpa [#allocation4], 1

</llo_original>
